<compile_context>
chip_gen: v6e
topology: v6e:2x2x1
jax: 0.10.0
libtpu: 0.0.40
codegen_flags: <defaults>
</compile_context>

<pallas_src>
import jax
import jax.numpy as jnp
from jax.experimental import pallas as pl
from jax.experimental.pallas import tpu as pltpu

LANE = 128      # vreg lane count (fast axis)
SUBLANE = 8     # vreg sublane count for f32


def autoencoder_kernel(x_ref,
                       w1_ref, b1_ref,    # encoder Linear(2,4)  (out, in)
                       w2_ref, b2_ref,    # encoder Linear(4,2)
                       w3_ref, b3_ref,    # decoder Linear(2,4)
                       w4h_ref, b4h_ref,  # decoder Linear(4,2), pre-scaled 0.5
                       o_ref):
    # x block is (2, rows_blk, 128): feature-major, batch packed densely on
    # sublanes x lanes, so every op below works on full (8,128) vregs.
    x0 = x_ref[0]                          # (rows_blk, 128)
    x1 = x_ref[1]

    # ---- encoder: Linear(2,4) + ReLU (unrolled VPU broadcast-FMAs) ----
    h1 = [jnp.maximum(w1_ref[j, 0] * x0 + w1_ref[j, 1] * x1 + b1_ref[j], 0.0)
          for j in range(4)]

    # ---- encoder: Linear(4,2) ----
    enc = [w2_ref[j, 0] * h1[0] + w2_ref[j, 1] * h1[1]
           + w2_ref[j, 2] * h1[2] + w2_ref[j, 3] * h1[3] + b2_ref[j]
           for j in range(2)]

    # ---- decoder: Linear(2,4) + ReLU ----
    h2 = [jnp.maximum(w3_ref[j, 0] * enc[0] + w3_ref[j, 1] * enc[1]
                      + b3_ref[j], 0.0)
          for j in range(4)]

    # ---- decoder: Linear(4,2) + Sigmoid ----
    # sigmoid(z) = 0.5*tanh(0.5*z) + 0.5; the 0.5*z pre-scale is folded into
    # w4h/b4h on the host, so this is one EUP tanh + one mul + one add.
    for j in range(2):
        zh = (w4h_ref[j, 0] * h2[0] + w4h_ref[j, 1] * h2[1]
              + w4h_ref[j, 2] * h2[2] + w4h_ref[j, 3] * h2[3] + b4h_ref[j])
        o_ref[j] = (0.5 * jnp.tanh(zh) + 0.5).astype(o_ref.dtype)  # (rows,128)


def _round_up(n, m):
    return (n + m - 1) // m * m


def _pick_rows_block(total_rows, target_block_bytes):
    """Rows (sublane axis) per grid step for the (2, rows_blk, 128) block.

    ~1 MiB payload/step amortizes the ~0.35 us/step grid overhead while the
    double-buffered in+out (~4x block bytes) stays far below the scoped VMEM
    defaults on every generation (v5e 16 MiB, v6e/v7x 32 MiB).  Batches big
    enough to matter still produce >= 2 "parallel" steps for v7x's 2 TCs.
    """
    bytes_per_row = 2 * LANE * 4                       # f32, 2 features
    target_rows = max(
        SUBLANE, (target_block_bytes // bytes_per_row) // SUBLANE * SUBLANE)
    if total_rows <= target_rows:
        return _round_up(max(total_rows, 1), SUBLANE)
    return target_rows


def autoencoder_forward_fm(xt, params, *, target_block_bytes=1 << 20):
    """Feature-major fast path: xt is (2, B) float32; returns (2, B).

    No boundary transposes: use this entry point when activations already
    live feature-major to keep end-to-end HBM traffic at the kernel's own
    read+write.
    """
    two, B = xt.shape
    assert two == 2
    dtype = xt.dtype

    rows = pl.cdiv(B, LANE)
    rows_blk = _pick_rows_block(rows, target_block_bytes)
    rows_pad = _round_up(rows, rows_blk)       # throwaway-tail padding
    bp = rows_pad * LANE

    if bp != B:
        xt = jnp.pad(xt, ((0, 0), (0, bp - B)))
    xp = xt.reshape(2, rows_pad, LANE)         # batch on sublanes x lanes

    # Fold the sigmoid's 0.5 pre-scale into the last Linear (10 scalars, host).
    w4h = 0.5 * params["w4"]
    b4h = 0.5 * params["b4"]

    smem = pl.BlockSpec(memory_space=pltpu.MemorySpace.SMEM)
    blk = pl.BlockSpec((2, rows_blk, LANE), lambda i: (0, i, 0))

    out = pl.pallas_call(
        autoencoder_kernel,
        out_shape=jax.ShapeDtypeStruct((2, rows_pad, LANE), dtype),
        grid=(rows_pad // rows_blk,),
        in_specs=[blk,
                  smem, smem,     # w1, b1
                  smem, smem,     # w2, b2
                  smem, smem,     # w3, b3
                  smem, smem],    # w4h, b4h
        out_specs=blk,
        compiler_params=pltpu.CompilerParams(
            dimension_semantics=("parallel",)),
    )(xp, params["w1"], params["b1"], params["w2"], params["b2"],
      params["w3"], params["b3"], w4h, b4h)

    return out.reshape(2, bp)[:, :B]


def autoencoder_forward(x, params, **kw):
    """PyTorch-layout interface: x (B, 2) float32 -> (B, 2).

    The two transposes are extra HBM layout passes; callers that can keep
    data feature-major should call autoencoder_forward_fm directly.
    """
    return autoencoder_forward_fm(x.T, params, **kw).T


def init_params(key):
    """Deterministic synthetic parameters with PyTorch nn.Linear shapes."""
    ks = jax.random.split(key, 8)

    def u(k, shape, fan_in):
        bound = 1.0 / jnp.sqrt(fan_in)
        return jax.random.uniform(k, shape, jnp.float32, -bound, bound)

    return {
        "w1": u(ks[0], (4, 2), 2), "b1": u(ks[1], (4,), 2),
        "w2": u(ks[2], (2, 4), 4), "b2": u(ks[3], (2,), 4),
        "w3": u(ks[4], (4, 2), 2), "b3": u(ks[5], (4,), 2),
        "w4": u(ks[6], (2, 4), 4), "b4": u(ks[7], (2,), 4),
    }


def reference_forward(x, p):
    """Plain-JAX reference identical to the PyTorch forward."""
    h = jnp.maximum(x @ p["w1"].T + p["b1"], 0.0)
    enc = h @ p["w2"].T + p["b2"]
    h2 = jnp.maximum(enc @ p["w3"].T + p["b3"], 0.0)
    dec = h2 @ p["w4"].T + p["b4"]
    return jax.nn.sigmoid(dec)


if __name__ == "__main__":
    key = jax.random.PRNGKey(0)
    kx, kp = jax.random.split(key)
    params = init_params(kp)

    # Small lane-aligned batch through the PyTorch-layout interface.
    B = 256
    x = jax.random.normal(kx, (B, 2), jnp.float32)
    out = jax.block_until_ready(autoencoder_forward(x, params))
    ref = reference_forward(x, params)
    assert out.shape == (B, 2)
    assert jnp.allclose(out, ref, atol=1e-5, rtol=1e-5)

    # Ragged batch exercises the throwaway-tail padding path.
    B2 = 20
    x2 = jax.random.normal(kx, (B2, 2), jnp.float32)
    out2 = jax.block_until_ready(autoencoder_forward(x2, params))
    ref2 = reference_forward(x2, params)
    assert out2.shape == (B2, 2)
    assert jnp.allclose(out2, ref2, atol=1e-5, rtol=1e-5)

    # Feature-major fast path with a tiny block budget to force a multi-step
    # "parallel" grid (exercises the multi-block / megacore-sharded path).
    B3 = 2048
    x3 = jax.random.normal(kx, (B3, 2), jnp.float32)
    out3 = jax.block_until_ready(
        autoencoder_forward_fm(x3.T, params, target_block_bytes=8 * 1024))
    ref3 = reference_forward(x3, params)
    assert out3.shape == (2, B3)
    assert jnp.allclose(out3.T, ref3, atol=1e-5, rtol=1e-5)

    print("KERNEL_OK")
</pallas_src>

<mosaic_0001>
module attributes {stable_mosaic.version = 11 : i64} {
  func.func @autoencoder_kernel(%arg0: i32, %arg1: memref<2x8x128xf32, #tpu.memory_space<vmem>>, %arg2: memref<4x2xf32, #tpu.memory_space<smem>>, %arg3: memref<4xf32, #tpu.memory_space<smem>>, %arg4: memref<2x4xf32, #tpu.memory_space<smem>>, %arg5: memref<2xf32, #tpu.memory_space<smem>>, %arg6: memref<4x2xf32, #tpu.memory_space<smem>>, %arg7: memref<4xf32, #tpu.memory_space<smem>>, %arg8: memref<2x4xf32, #tpu.memory_space<smem>>, %arg9: memref<2xf32, #tpu.memory_space<smem>>, %arg10: memref<2x8x128xf32, #tpu.memory_space<vmem>>) attributes {dimension_semantics = [#tpu.dimension_semantics<parallel>], iteration_bounds = array<i64: 1>, scalar_prefetch = 0 : i64, scratch_operands = 0 : i64, tpu.core_type = #tpu.core_type<tc>, window_params = [{transform_indices = @transform_0, window_bounds = array<i64: 2, 8, 128>}, {transform_indices = @transform_1, window_bounds = array<i64: 4, 2>}, {transform_indices = @transform_2, window_bounds = array<i64: 4>}, {transform_indices = @transform_3, window_bounds = array<i64: 2, 4>}, {transform_indices = @transform_4, window_bounds = array<i64: 2>}, {transform_indices = @transform_5, window_bounds = array<i64: 4, 2>}, {transform_indices = @transform_6, window_bounds = array<i64: 4>}, {transform_indices = @transform_7, window_bounds = array<i64: 2, 4>}, {transform_indices = @transform_8, window_bounds = array<i64: 2>}, {transform_indices = @transform_9, window_bounds = array<i64: 2, 8, 128>}]} {
    %c0 = arith.constant 0 : index
    %c0_0 = arith.constant 0 : index
    %c0_1 = arith.constant 0 : index
    %0 = vector.load %arg1[%c0, %c0_0, %c0_1] : memref<2x8x128xf32, #tpu.memory_space<vmem>>, vector<1x8x128xf32>
    %1 = vector.shape_cast %0 : vector<1x8x128xf32> to vector<8x128xf32>
    %c1 = arith.constant 1 : index
    %c0_2 = arith.constant 0 : index
    %c0_3 = arith.constant 0 : index
    %2 = vector.load %arg1[%c1, %c0_2, %c0_3] : memref<2x8x128xf32, #tpu.memory_space<vmem>>, vector<1x8x128xf32>
    %3 = vector.shape_cast %2 : vector<1x8x128xf32> to vector<8x128xf32>
    %c0_4 = arith.constant 0 : index
    %c0_5 = arith.constant 0 : index
    %4 = memref.load %arg2[%c0_4, %c0_5] : memref<4x2xf32, #tpu.memory_space<smem>>
    %5 = vector.broadcast %4 : f32 to vector<8x128xf32>
    %6 = arith.mulf %5, %1 : vector<8x128xf32>
    %c0_6 = arith.constant 0 : index
    %c1_7 = arith.constant 1 : index
    %7 = memref.load %arg2[%c0_6, %c1_7] : memref<4x2xf32, #tpu.memory_space<smem>>
    %8 = vector.broadcast %7 : f32 to vector<8x128xf32>
    %9 = arith.mulf %8, %3 : vector<8x128xf32>
    %10 = arith.addf %6, %9 : vector<8x128xf32>
    %c0_8 = arith.constant 0 : index
    %11 = memref.load %arg3[%c0_8] : memref<4xf32, #tpu.memory_space<smem>>
    %12 = vector.broadcast %11 : f32 to vector<8x128xf32>
    %13 = arith.addf %10, %12 : vector<8x128xf32>
    %cst = arith.constant 0.000000e+00 : f32
    %14 = vector.broadcast %cst : f32 to vector<8x128xf32>
    %15 = arith.maximumf %13, %14 : vector<8x128xf32>
    %c1_9 = arith.constant 1 : index
    %c0_10 = arith.constant 0 : index
    %16 = memref.load %arg2[%c1_9, %c0_10] : memref<4x2xf32, #tpu.memory_space<smem>>
    %17 = vector.broadcast %16 : f32 to vector<8x128xf32>
    %18 = arith.mulf %17, %1 : vector<8x128xf32>
    %c1_11 = arith.constant 1 : index
    %c1_12 = arith.constant 1 : index
    %19 = memref.load %arg2[%c1_11, %c1_12] : memref<4x2xf32, #tpu.memory_space<smem>>
    %20 = vector.broadcast %19 : f32 to vector<8x128xf32>
    %21 = arith.mulf %20, %3 : vector<8x128xf32>
    %22 = arith.addf %18, %21 : vector<8x128xf32>
    %c1_13 = arith.constant 1 : index
    %23 = memref.load %arg3[%c1_13] : memref<4xf32, #tpu.memory_space<smem>>
    %24 = vector.broadcast %23 : f32 to vector<8x128xf32>
    %25 = arith.addf %22, %24 : vector<8x128xf32>
    %cst_14 = arith.constant 0.000000e+00 : f32
    %26 = vector.broadcast %cst_14 : f32 to vector<8x128xf32>
    %27 = arith.maximumf %25, %26 : vector<8x128xf32>
    %c2 = arith.constant 2 : index
    %c0_15 = arith.constant 0 : index
    %28 = memref.load %arg2[%c2, %c0_15] : memref<4x2xf32, #tpu.memory_space<smem>>
    %29 = vector.broadcast %28 : f32 to vector<8x128xf32>
    %30 = arith.mulf %29, %1 : vector<8x128xf32>
    %c2_16 = arith.constant 2 : index
    %c1_17 = arith.constant 1 : index
    %31 = memref.load %arg2[%c2_16, %c1_17] : memref<4x2xf32, #tpu.memory_space<smem>>
    %32 = vector.broadcast %31 : f32 to vector<8x128xf32>
    %33 = arith.mulf %32, %3 : vector<8x128xf32>
    %34 = arith.addf %30, %33 : vector<8x128xf32>
    %c2_18 = arith.constant 2 : index
    %35 = memref.load %arg3[%c2_18] : memref<4xf32, #tpu.memory_space<smem>>
    %36 = vector.broadcast %35 : f32 to vector<8x128xf32>
    %37 = arith.addf %34, %36 : vector<8x128xf32>
    %cst_19 = arith.constant 0.000000e+00 : f32
    %38 = vector.broadcast %cst_19 : f32 to vector<8x128xf32>
    %39 = arith.maximumf %37, %38 : vector<8x128xf32>
    %c3 = arith.constant 3 : index
    %c0_20 = arith.constant 0 : index
    %40 = memref.load %arg2[%c3, %c0_20] : memref<4x2xf32, #tpu.memory_space<smem>>
    %41 = vector.broadcast %40 : f32 to vector<8x128xf32>
    %42 = arith.mulf %41, %1 : vector<8x128xf32>
    %c3_21 = arith.constant 3 : index
    %c1_22 = arith.constant 1 : index
    %43 = memref.load %arg2[%c3_21, %c1_22] : memref<4x2xf32, #tpu.memory_space<smem>>
    %44 = vector.broadcast %43 : f32 to vector<8x128xf32>
    %45 = arith.mulf %44, %3 : vector<8x128xf32>
    %46 = arith.addf %42, %45 : vector<8x128xf32>
    %c3_23 = arith.constant 3 : index
    %47 = memref.load %arg3[%c3_23] : memref<4xf32, #tpu.memory_space<smem>>
    %48 = vector.broadcast %47 : f32 to vector<8x128xf32>
    %49 = arith.addf %46, %48 : vector<8x128xf32>
    %cst_24 = arith.constant 0.000000e+00 : f32
    %50 = vector.broadcast %cst_24 : f32 to vector<8x128xf32>
    %51 = arith.maximumf %49, %50 : vector<8x128xf32>
    %c0_25 = arith.constant 0 : index
    %c0_26 = arith.constant 0 : index
    %52 = memref.load %arg4[%c0_25, %c0_26] : memref<2x4xf32, #tpu.memory_space<smem>>
    %53 = vector.broadcast %52 : f32 to vector<8x128xf32>
    %54 = arith.mulf %53, %15 : vector<8x128xf32>
    %c0_27 = arith.constant 0 : index
    %c1_28 = arith.constant 1 : index
    %55 = memref.load %arg4[%c0_27, %c1_28] : memref<2x4xf32, #tpu.memory_space<smem>>
    %56 = vector.broadcast %55 : f32 to vector<8x128xf32>
    %57 = arith.mulf %56, %27 : vector<8x128xf32>
    %58 = arith.addf %54, %57 : vector<8x128xf32>
    %c0_29 = arith.constant 0 : index
    %c2_30 = arith.constant 2 : index
    %59 = memref.load %arg4[%c0_29, %c2_30] : memref<2x4xf32, #tpu.memory_space<smem>>
    %60 = vector.broadcast %59 : f32 to vector<8x128xf32>
    %61 = arith.mulf %60, %39 : vector<8x128xf32>
    %62 = arith.addf %58, %61 : vector<8x128xf32>
    %c0_31 = arith.constant 0 : index
    %c3_32 = arith.constant 3 : index
    %63 = memref.load %arg4[%c0_31, %c3_32] : memref<2x4xf32, #tpu.memory_space<smem>>
    %64 = vector.broadcast %63 : f32 to vector<8x128xf32>
    %65 = arith.mulf %64, %51 : vector<8x128xf32>
    %66 = arith.addf %62, %65 : vector<8x128xf32>
    %c0_33 = arith.constant 0 : index
    %67 = memref.load %arg5[%c0_33] : memref<2xf32, #tpu.memory_space<smem>>
    %68 = vector.broadcast %67 : f32 to vector<8x128xf32>
    %69 = arith.addf %66, %68 : vector<8x128xf32>
    %c1_34 = arith.constant 1 : index
    %c0_35 = arith.constant 0 : index
    %70 = memref.load %arg4[%c1_34, %c0_35] : memref<2x4xf32, #tpu.memory_space<smem>>
    %71 = vector.broadcast %70 : f32 to vector<8x128xf32>
    %72 = arith.mulf %71, %15 : vector<8x128xf32>
    %c1_36 = arith.constant 1 : index
    %c1_37 = arith.constant 1 : index
    %73 = memref.load %arg4[%c1_36, %c1_37] : memref<2x4xf32, #tpu.memory_space<smem>>
    %74 = vector.broadcast %73 : f32 to vector<8x128xf32>
    %75 = arith.mulf %74, %27 : vector<8x128xf32>
    %76 = arith.addf %72, %75 : vector<8x128xf32>
    %c1_38 = arith.constant 1 : index
    %c2_39 = arith.constant 2 : index
    %77 = memref.load %arg4[%c1_38, %c2_39] : memref<2x4xf32, #tpu.memory_space<smem>>
    %78 = vector.broadcast %77 : f32 to vector<8x128xf32>
    %79 = arith.mulf %78, %39 : vector<8x128xf32>
    %80 = arith.addf %76, %79 : vector<8x128xf32>
    %c1_40 = arith.constant 1 : index
    %c3_41 = arith.constant 3 : index
    %81 = memref.load %arg4[%c1_40, %c3_41] : memref<2x4xf32, #tpu.memory_space<smem>>
    %82 = vector.broadcast %81 : f32 to vector<8x128xf32>
    %83 = arith.mulf %82, %51 : vector<8x128xf32>
    %84 = arith.addf %80, %83 : vector<8x128xf32>
    %c1_42 = arith.constant 1 : index
    %85 = memref.load %arg5[%c1_42] : memref<2xf32, #tpu.memory_space<smem>>
    %86 = vector.broadcast %85 : f32 to vector<8x128xf32>
    %87 = arith.addf %84, %86 : vector<8x128xf32>
    %c0_43 = arith.constant 0 : index
    %c0_44 = arith.constant 0 : index
    %88 = memref.load %arg6[%c0_43, %c0_44] : memref<4x2xf32, #tpu.memory_space<smem>>
    %89 = vector.broadcast %88 : f32 to vector<8x128xf32>
    %90 = arith.mulf %89, %69 : vector<8x128xf32>
    %c0_45 = arith.constant 0 : index
    %c1_46 = arith.constant 1 : index
    %91 = memref.load %arg6[%c0_45, %c1_46] : memref<4x2xf32, #tpu.memory_space<smem>>
    %92 = vector.broadcast %91 : f32 to vector<8x128xf32>
    %93 = arith.mulf %92, %87 : vector<8x128xf32>
    %94 = arith.addf %90, %93 : vector<8x128xf32>
    %c0_47 = arith.constant 0 : index
    %95 = memref.load %arg7[%c0_47] : memref<4xf32, #tpu.memory_space<smem>>
    %96 = vector.broadcast %95 : f32 to vector<8x128xf32>
    %97 = arith.addf %94, %96 : vector<8x128xf32>
    %cst_48 = arith.constant 0.000000e+00 : f32
    %98 = vector.broadcast %cst_48 : f32 to vector<8x128xf32>
    %99 = arith.maximumf %97, %98 : vector<8x128xf32>
    %c1_49 = arith.constant 1 : index
    %c0_50 = arith.constant 0 : index
    %100 = memref.load %arg6[%c1_49, %c0_50] : memref<4x2xf32, #tpu.memory_space<smem>>
    %101 = vector.broadcast %100 : f32 to vector<8x128xf32>
    %102 = arith.mulf %101, %69 : vector<8x128xf32>
    %c1_51 = arith.constant 1 : index
    %c1_52 = arith.constant 1 : index
    %103 = memref.load %arg6[%c1_51, %c1_52] : memref<4x2xf32, #tpu.memory_space<smem>>
    %104 = vector.broadcast %103 : f32 to vector<8x128xf32>
    %105 = arith.mulf %104, %87 : vector<8x128xf32>
    %106 = arith.addf %102, %105 : vector<8x128xf32>
    %c1_53 = arith.constant 1 : index
    %107 = memref.load %arg7[%c1_53] : memref<4xf32, #tpu.memory_space<smem>>
    %108 = vector.broadcast %107 : f32 to vector<8x128xf32>
    %109 = arith.addf %106, %108 : vector<8x128xf32>
    %cst_54 = arith.constant 0.000000e+00 : f32
    %110 = vector.broadcast %cst_54 : f32 to vector<8x128xf32>
    %111 = arith.maximumf %109, %110 : vector<8x128xf32>
    %c2_55 = arith.constant 2 : index
    %c0_56 = arith.constant 0 : index
    %112 = memref.load %arg6[%c2_55, %c0_56] : memref<4x2xf32, #tpu.memory_space<smem>>
    %113 = vector.broadcast %112 : f32 to vector<8x128xf32>
    %114 = arith.mulf %113, %69 : vector<8x128xf32>
    %c2_57 = arith.constant 2 : index
    %c1_58 = arith.constant 1 : index
    %115 = memref.load %arg6[%c2_57, %c1_58] : memref<4x2xf32, #tpu.memory_space<smem>>
    %116 = vector.broadcast %115 : f32 to vector<8x128xf32>
    %117 = arith.mulf %116, %87 : vector<8x128xf32>
    %118 = arith.addf %114, %117 : vector<8x128xf32>
    %c2_59 = arith.constant 2 : index
    %119 = memref.load %arg7[%c2_59] : memref<4xf32, #tpu.memory_space<smem>>
    %120 = vector.broadcast %119 : f32 to vector<8x128xf32>
    %121 = arith.addf %118, %120 : vector<8x128xf32>
    %cst_60 = arith.constant 0.000000e+00 : f32
    %122 = vector.broadcast %cst_60 : f32 to vector<8x128xf32>
    %123 = arith.maximumf %121, %122 : vector<8x128xf32>
    %c3_61 = arith.constant 3 : index
    %c0_62 = arith.constant 0 : index
    %124 = memref.load %arg6[%c3_61, %c0_62] : memref<4x2xf32, #tpu.memory_space<smem>>
    %125 = vector.broadcast %124 : f32 to vector<8x128xf32>
    %126 = arith.mulf %125, %69 : vector<8x128xf32>
    %c3_63 = arith.constant 3 : index
    %c1_64 = arith.constant 1 : index
    %127 = memref.load %arg6[%c3_63, %c1_64] : memref<4x2xf32, #tpu.memory_space<smem>>
    %128 = vector.broadcast %127 : f32 to vector<8x128xf32>
    %129 = arith.mulf %128, %87 : vector<8x128xf32>
    %130 = arith.addf %126, %129 : vector<8x128xf32>
    %c3_65 = arith.constant 3 : index
    %131 = memref.load %arg7[%c3_65] : memref<4xf32, #tpu.memory_space<smem>>
    %132 = vector.broadcast %131 : f32 to vector<8x128xf32>
    %133 = arith.addf %130, %132 : vector<8x128xf32>
    %cst_66 = arith.constant 0.000000e+00 : f32
    %134 = vector.broadcast %cst_66 : f32 to vector<8x128xf32>
    %135 = arith.maximumf %133, %134 : vector<8x128xf32>
    %c0_67 = arith.constant 0 : index
    %c0_68 = arith.constant 0 : index
    %136 = memref.load %arg8[%c0_67, %c0_68] : memref<2x4xf32, #tpu.memory_space<smem>>
    %137 = vector.broadcast %136 : f32 to vector<8x128xf32>
    %138 = arith.mulf %137, %99 : vector<8x128xf32>
    %c0_69 = arith.constant 0 : index
    %c1_70 = arith.constant 1 : index
    %139 = memref.load %arg8[%c0_69, %c1_70] : memref<2x4xf32, #tpu.memory_space<smem>>
    %140 = vector.broadcast %139 : f32 to vector<8x128xf32>
    %141 = arith.mulf %140, %111 : vector<8x128xf32>
    %142 = arith.addf %138, %141 : vector<8x128xf32>
    %c0_71 = arith.constant 0 : index
    %c2_72 = arith.constant 2 : index
    %143 = memref.load %arg8[%c0_71, %c2_72] : memref<2x4xf32, #tpu.memory_space<smem>>
    %144 = vector.broadcast %143 : f32 to vector<8x128xf32>
    %145 = arith.mulf %144, %123 : vector<8x128xf32>
    %146 = arith.addf %142, %145 : vector<8x128xf32>
    %c0_73 = arith.constant 0 : index
    %c3_74 = arith.constant 3 : index
    %147 = memref.load %arg8[%c0_73, %c3_74] : memref<2x4xf32, #tpu.memory_space<smem>>
    %148 = vector.broadcast %147 : f32 to vector<8x128xf32>
    %149 = arith.mulf %148, %135 : vector<8x128xf32>
    %150 = arith.addf %146, %149 : vector<8x128xf32>
    %c0_75 = arith.constant 0 : index
    %151 = memref.load %arg9[%c0_75] : memref<2xf32, #tpu.memory_space<smem>>
    %152 = vector.broadcast %151 : f32 to vector<8x128xf32>
    %153 = arith.addf %150, %152 : vector<8x128xf32>
    %154 = math.tanh %153 : vector<8x128xf32>
    %cst_76 = arith.constant 5.000000e-01 : f32
    %155 = vector.broadcast %cst_76 : f32 to vector<8x128xf32>
    %156 = arith.mulf %155, %154 : vector<8x128xf32>
    %cst_77 = arith.constant 5.000000e-01 : f32
    %157 = vector.broadcast %cst_77 : f32 to vector<8x128xf32>
    %158 = arith.addf %156, %157 : vector<8x128xf32>
    %c0_78 = arith.constant 0 : index
    %c0_79 = arith.constant 0 : index
    %c0_80 = arith.constant 0 : index
    %159 = vector.load %arg10[%c0_78, %c0_79, %c0_80] : memref<2x8x128xf32, #tpu.memory_space<vmem>>, vector<1x8x128xf32>
    %160 = vector.shape_cast %159 : vector<1x8x128xf32> to vector<8x128xf32>
    %161 = vector.shape_cast %158 : vector<8x128xf32> to vector<1x8x128xf32>
    tpu.vector_store %arg10[%c0_78, %c0_79, %c0_80], %161 {strides = array<i32>} : memref<2x8x128xf32, #tpu.memory_space<vmem>>, vector<1x8x128xf32>,
    %c1_81 = arith.constant 1 : index
    %c0_82 = arith.constant 0 : index
    %162 = memref.load %arg8[%c1_81, %c0_82] : memref<2x4xf32, #tpu.memory_space<smem>>
    %163 = vector.broadcast %162 : f32 to vector<8x128xf32>
    %164 = arith.mulf %163, %99 : vector<8x128xf32>
    %c1_83 = arith.constant 1 : index
    %c1_84 = arith.constant 1 : index
    %165 = memref.load %arg8[%c1_83, %c1_84] : memref<2x4xf32, #tpu.memory_space<smem>>
    %166 = vector.broadcast %165 : f32 to vector<8x128xf32>
    %167 = arith.mulf %166, %111 : vector<8x128xf32>
    %168 = arith.addf %164, %167 : vector<8x128xf32>
    %c1_85 = arith.constant 1 : index
    %c2_86 = arith.constant 2 : index
    %169 = memref.load %arg8[%c1_85, %c2_86] : memref<2x4xf32, #tpu.memory_space<smem>>
    %170 = vector.broadcast %169 : f32 to vector<8x128xf32>
    %171 = arith.mulf %170, %123 : vector<8x128xf32>
    %172 = arith.addf %168, %171 : vector<8x128xf32>
    %c1_87 = arith.constant 1 : index
    %c3_88 = arith.constant 3 : index
    %173 = memref.load %arg8[%c1_87, %c3_88] : memref<2x4xf32, #tpu.memory_space<smem>>
    %174 = vector.broadcast %173 : f32 to vector<8x128xf32>
    %175 = arith.mulf %174, %135 : vector<8x128xf32>
    %176 = arith.addf %172, %175 : vector<8x128xf32>
    %c1_89 = arith.constant 1 : index
    %177 = memref.load %arg9[%c1_89] : memref<2xf32, #tpu.memory_space<smem>>
    %178 = vector.broadcast %177 : f32 to vector<8x128xf32>
    %179 = arith.addf %176, %178 : vector<8x128xf32>
    %180 = math.tanh %179 : vector<8x128xf32>
    %cst_90 = arith.constant 5.000000e-01 : f32
    %181 = vector.broadcast %cst_90 : f32 to vector<8x128xf32>
    %182 = arith.mulf %181, %180 : vector<8x128xf32>
    %cst_91 = arith.constant 5.000000e-01 : f32
    %183 = vector.broadcast %cst_91 : f32 to vector<8x128xf32>
    %184 = arith.addf %182, %183 : vector<8x128xf32>
    %c1_92 = arith.constant 1 : index
    %c0_93 = arith.constant 0 : index
    %c0_94 = arith.constant 0 : index
    %185 = vector.load %arg10[%c1_92, %c0_93, %c0_94] : memref<2x8x128xf32, #tpu.memory_space<vmem>>, vector<1x8x128xf32>
    %186 = vector.shape_cast %185 : vector<1x8x128xf32> to vector<8x128xf32>
    %187 = vector.shape_cast %184 : vector<8x128xf32> to vector<1x8x128xf32>
    tpu.vector_store %arg10[%c1_92, %c0_93, %c0_94], %187 {strides = array<i32>} : memref<2x8x128xf32, #tpu.memory_space<vmem>>, vector<1x8x128xf32>,
    return
  }
  func.func @transform_0(%arg0: i32) -> (i32, i32, i32) {
    %c0_i32 = arith.constant 0 : i32
    %c0_i32_0 = arith.constant 0 : i32
    %c0_i32_1 = arith.constant 0 : i32
    return %c0_i32, %arg0, %c0_i32_0 : i32, i32, i32
  }
  func.func @transform_1(%arg0: i32) -> (i32, i32) {
    %c0_i32 = arith.constant 0 : i32
    %c0_i32_0 = arith.constant 0 : i32
    %c0_i32_1 = arith.constant 0 : i32
    return %c0_i32, %c0_i32_0 : i32, i32
  }
  func.func @transform_2(%arg0: i32) -> i32 {
    %c0_i32 = arith.constant 0 : i32
    %c0_i32_0 = arith.constant 0 : i32
    return %c0_i32 : i32
  }
  func.func @transform_3(%arg0: i32) -> (i32, i32) {
    %c0_i32 = arith.constant 0 : i32
    %c0_i32_0 = arith.constant 0 : i32
    %c0_i32_1 = arith.constant 0 : i32
    return %c0_i32, %c0_i32_0 : i32, i32
  }
  func.func @transform_4(%arg0: i32) -> i32 {
    %c0_i32 = arith.constant 0 : i32
    %c0_i32_0 = arith.constant 0 : i32
    return %c0_i32 : i32
  }
  func.func @transform_5(%arg0: i32) -> (i32, i32) {
    %c0_i32 = arith.constant 0 : i32
    %c0_i32_0 = arith.constant 0 : i32
    %c0_i32_1 = arith.constant 0 : i32
    return %c0_i32, %c0_i32_0 : i32, i32
  }
  func.func @transform_6(%arg0: i32) -> i32 {
    %c0_i32 = arith.constant 0 : i32
    %c0_i32_0 = arith.constant 0 : i32
    return %c0_i32 : i32
  }
  func.func @transform_7(%arg0: i32) -> (i32, i32) {
    %c0_i32 = arith.constant 0 : i32
    %c0_i32_0 = arith.constant 0 : i32
    %c0_i32_1 = arith.constant 0 : i32
    return %c0_i32, %c0_i32_0 : i32, i32
  }
  func.func @transform_8(%arg0: i32) -> i32 {
    %c0_i32 = arith.constant 0 : i32
    %c0_i32_0 = arith.constant 0 : i32
    return %c0_i32 : i32
  }
  func.func @transform_9(%arg0: i32) -> (i32, i32, i32) {
    %c0_i32 = arith.constant 0 : i32
    %c0_i32_0 = arith.constant 0 : i32
    %c0_i32_1 = arith.constant 0 : i32
    return %c0_i32, %arg0, %c0_i32_0 : i32, i32, i32
  }
}

</mosaic_0001>

<llo_original>
// kernel: tpu_custom_call.1
$region0: #{tpu_custom_call.1}
  #allocation0 [shape = 'u32[]', space=smem, size = 0x4, offset = 0x4, fixed_abs, tag = 'smem constant byte address 0x4 - core index']
  #allocation1 [shape = 'u32[144,128]{1,0:T(1,128)}', space=vmem, size = 0x12000, scoped, tag = 'internal scratch']
  %s0 = inlined_call_operand.hbm [shape: f32[2,8,128], index: 0, kind: input, shape index: {}]
  %s1 = inlined_call_operand.vmem [shape: f32[4,2], index: 1, kind: input, shape index: {}]
  %s2 = inlined_call_operand.vmem [shape: f32[4], index: 2, kind: input, shape index: {}]
  %s3 = inlined_call_operand.vmem [shape: f32[2,4], index: 3, kind: input, shape index: {}]
  %s4 = inlined_call_operand.vmem [shape: f32[2], index: 4, kind: input, shape index: {}]
  %s5 = inlined_call_operand.vmem [shape: f32[4,2], index: 5, kind: input, shape index: {}]
  %s6 = inlined_call_operand.vmem [shape: f32[4], index: 6, kind: input, shape index: {}]
  %s7 = inlined_call_operand.vmem [shape: f32[2,4], index: 7, kind: input, shape index: {}]
  %s8 = inlined_call_operand.vmem [shape: f32[2], index: 8, kind: input, shape index: {}]
  %s9 = inlined_call_operand.hbm [shape: f32[2,8,128], index: 9, kind: output, shape index: {}]
  %s10 = sld [smem:[#allocation0]]
  $region82: #{tpu_custom_call.1} parent=0
    _
  %s12 = ssub.s32 1, %s10
  %s13 = scalar_select 0, %s12, %s10
  $region1: #{tpu_custom_call.1} parent=0
    #allocation2 [shape = 'u8[8192]{0}', space=vmem, size = 0x2000, scoped, tag = 'input window, operand 0, single buffered']
    #allocation3 [shape = 's32[1]{0}', space=sflag, size = 0x4, scoped, tag = 'scoped memory for tpu_custom_call.1']
    #allocation4 [shape = 's32[1]{0}', space=sflag, size = 0x4, scoped, tag = 'scoped memory for tpu_custom_call.1']
    #allocation5 [shape = 's32[1]{0}', space=sflag, size = 0x4, scoped, tag = 'scoped memory for tpu_custom_call.1']
    #allocation6 [shape = 'u8[2048]{0}', space=smem, size = 0x800, scoped, tag = 'input window, operand 1, single buffered']
    #allocation7 [shape = 'u8[512]{0}', space=smem, size = 0x200, scoped, tag = 'input window, operand 2, single buffered']
    #allocation8 [shape = 's32[1]{0}', space=sflag, size = 0x4, scoped, tag = 'scoped memory for tpu_custom_call.1']
    #allocation9 [shape = 'u8[1024]{0}', space=smem, size = 0x400, scoped, tag = 'input window, operand 3, single buffered']
    #allocation10 [shape = 'u8[512]{0}', space=smem, size = 0x200, scoped, tag = 'input window, operand 4, single buffered']
    #allocation11 [shape = 's32[1]{0}', space=sflag, size = 0x4, scoped, tag = 'scoped memory for tpu_custom_call.1']
    #allocation12 [shape = 'u8[2048]{0}', space=smem, size = 0x800, scoped, tag = 'input window, operand 5, single buffered']
    #allocation13 [shape = 'u8[512]{0}', space=smem, size = 0x200, scoped, tag = 'input window, operand 6, single buffered']
    #allocation14 [shape = 's32[1]{0}', space=sflag, size = 0x4, scoped, tag = 'scoped memory for tpu_custom_call.1']
    #allocation15 [shape = 'u8[1024]{0}', space=smem, size = 0x400, scoped, tag = 'input window, operand 7, single buffered']
    #allocation16 [shape = 'u8[512]{0}', space=smem, size = 0x200, scoped, tag = 'input window, operand 8, single buffered']
    #allocation17 [shape = 's32[1]{0}', space=sflag, size = 0x4, scoped, tag = 'scoped memory for tpu_custom_call.1']
    #allocation18 [shape = 'u8[8192]{0}', space=vmem, size = 0x2000, scoped, tag = 'output window, operand 0, single buffered']
    %14 = vsyncpa [#allocation3], 0
    %15 = vsyncpa [#allocation5], 0
    %16 = vsyncpa [#allocation8], 0
    %17 = vsyncpa [#allocation11], 0
    %18 = vsyncpa [#allocation14], 0
    %19 = vsyncpa [#allocation17], 0
    %20 = vsyncpa [#allocation4], 0
    // Predicated region
    $region2: #{tpu_custom_call.1} parent=1 // pred_check
      _
    $region3: #{tpu_custom_call.1} parent=1 // pred_check_branch
      %22 = sbr.rel (0) target = $region5
    $region4: #{tpu_custom_call.1} parent=1 // pred_region
      %s24 = ssub.s32 256, 256
      %25 = vsyncadd [#allocation3], %s24
      %s26 = sshll.u32 [#allocation2], 4
      %s27 = int_to_ptr.vmem [resolvable:$true] %s26
      %32 = dma.hbm_to_vmem [thread:$0]  %s0, 256, %s27, [#allocation3], 128, 128, 8
    $region5: #{tpu_custom_call.1} parent=1 // pred_fallthru
      _
    // Predicated region
    $region6: #{tpu_custom_call.1} parent=1 // pred_check
      _
    $region7: #{tpu_custom_call.1} parent=1 // pred_check_branch
      %34 = sbr.rel (0) target = $region9
    $region8: #{tpu_custom_call.1} parent=1 // pred_region
      %s36 = ssub.s32 64, 64
      %37 = vsyncadd [#allocation5], %s36
      %s39 = sshll.u32 %s1, 4
      %s40 = int_to_ptr.vmem [resolvable:$true] %s39
      %42 = dma.vmem_to_smem %s40, 64, [#allocation6], [#allocation5]
    $region9: #{tpu_custom_call.1} parent=1 // pred_fallthru
      _
    // Predicated region
    $region10: #{tpu_custom_call.1} parent=1 // pred_check
      _
    $region11: #{tpu_custom_call.1} parent=1 // pred_check_branch
      %44 = sbr.rel (0) target = $region13
    $region12: #{tpu_custom_call.1} parent=1 // pred_region
      %s46 = ssub.s32 16, 16
      %47 = vsyncadd [#allocation8], %s46
      %s49 = sshll.u32 %s2, 4
      %s50 = int_to_ptr.vmem [resolvable:$true] %s49
      %52 = dma.vmem_to_smem %s50, 16, [#allocation7], [#allocation8]
    $region13: #{tpu_custom_call.1} parent=1 // pred_fallthru
      _
    // Predicated region
    $region14: #{tpu_custom_call.1} parent=1 // pred_check
      _
    $region15: #{tpu_custom_call.1} parent=1 // pred_check_branch
      %54 = sbr.rel (0) target = $region17
    $region16: #{tpu_custom_call.1} parent=1 // pred_region
      %s56 = ssub.s32 32, 32
      %57 = vsyncadd [#allocation8], %s56
      %s59 = sshll.u32 %s3, 4
      %s60 = int_to_ptr.vmem [resolvable:$true] %s59
      %62 = dma.vmem_to_smem %s60, 32, [#allocation9], [#allocation8]
    $region17: #{tpu_custom_call.1} parent=1 // pred_fallthru
      _
    // Predicated region
    $region18: #{tpu_custom_call.1} parent=1 // pred_check
      _
    $region19: #{tpu_custom_call.1} parent=1 // pred_check_branch
      %64 = sbr.rel (0) target = $region21
    $region20: #{tpu_custom_call.1} parent=1 // pred_region
      %s66 = ssub.s32 16, 16
      %67 = vsyncadd [#allocation11], %s66
      %s69 = sshll.u32 %s4, 4
      %s70 = int_to_ptr.vmem [resolvable:$true] %s69
      %72 = dma.vmem_to_smem %s70, 16, [#allocation10], [#allocation11]
    $region21: #{tpu_custom_call.1} parent=1 // pred_fallthru
      _
    // Predicated region
    $region22: #{tpu_custom_call.1} parent=1 // pred_check
      _
    $region23: #{tpu_custom_call.1} parent=1 // pred_check_branch
      %74 = sbr.rel (0) target = $region25
    $region24: #{tpu_custom_call.1} parent=1 // pred_region
      %s76 = ssub.s32 64, 64
      %77 = vsyncadd [#allocation11], %s76
      %s79 = sshll.u32 %s5, 4
      %s80 = int_to_ptr.vmem [resolvable:$true] %s79
      %82 = dma.vmem_to_smem %s80, 64, [#allocation12], [#allocation11]
    $region25: #{tpu_custom_call.1} parent=1 // pred_fallthru
      _
    // Predicated region
    $region26: #{tpu_custom_call.1} parent=1 // pred_check
      _
    $region27: #{tpu_custom_call.1} parent=1 // pred_check_branch
      %84 = sbr.rel (0) target = $region29
    $region28: #{tpu_custom_call.1} parent=1 // pred_region
      %s86 = ssub.s32 16, 16
      %87 = vsyncadd [#allocation14], %s86
      %s89 = sshll.u32 %s6, 4
      %s90 = int_to_ptr.vmem [resolvable:$true] %s89
      %92 = dma.vmem_to_smem %s90, 16, [#allocation13], [#allocation14]
    $region29: #{tpu_custom_call.1} parent=1 // pred_fallthru
      _
    // Predicated region
    $region30: #{tpu_custom_call.1} parent=1 // pred_check
      _
    $region31: #{tpu_custom_call.1} parent=1 // pred_check_branch
      %94 = sbr.rel (0) target = $region33
    $region32: #{tpu_custom_call.1} parent=1 // pred_region
      %s96 = ssub.s32 32, 32
      %97 = vsyncadd [#allocation14], %s96
      %s99 = sshll.u32 %s7, 4
      %s100 = int_to_ptr.vmem [resolvable:$true] %s99
      %102 = dma.vmem_to_smem %s100, 32, [#allocation15], [#allocation14]
    $region33: #{tpu_custom_call.1} parent=1 // pred_fallthru
      _
    // Predicated region
    $region34: #{tpu_custom_call.1} parent=1 // pred_check
      _
    $region35: #{tpu_custom_call.1} parent=1 // pred_check_branch
      %104 = sbr.rel (0) target = $region37
    $region36: #{tpu_custom_call.1} parent=1 // pred_region
      %s106 = ssub.s32 16, 16
      %107 = vsyncadd [#allocation17], %s106
      %s109 = sshll.u32 %s8, 4
      %s110 = int_to_ptr.vmem [resolvable:$true] %s109
      %112 = dma.vmem_to_smem %s110, 16, [#allocation16], [#allocation17]
    $region37: #{tpu_custom_call.1} parent=1 // pred_fallthru
      _
    // Predicated region
    $region38: #{tpu_custom_call.1} parent=1 // pred_check
      _
    $region39: #{tpu_custom_call.1} parent=1 // pred_check_branch
      %114 = sbr.rel (0) target = $region41
    $region40: #{tpu_custom_call.1} parent=1 // pred_region
      %115 = dma.done [#allocation3], 256
    $region41: #{tpu_custom_call.1} parent=1 // pred_fallthru
      _
    // Predicated region
    $region42: #{tpu_custom_call.1} parent=1 // pred_check
      _
    $region43: #{tpu_custom_call.1} parent=1 // pred_check_branch
      %117 = sbr.rel (0) target = $region45
    $region44: #{tpu_custom_call.1} parent=1 // pred_region
      %118 = dma.done [#allocation5], 64
    $region45: #{tpu_custom_call.1} parent=1 // pred_fallthru
      _
    // Predicated region
    $region46: #{tpu_custom_call.1} parent=1 // pred_check
      _
    $region47: #{tpu_custom_call.1} parent=1 // pred_check_branch
      %120 = sbr.rel (0) target = $region49
    $region48: #{tpu_custom_call.1} parent=1 // pred_region
      %121 = dma.done [#allocation8], 16
    $region49: #{tpu_custom_call.1} parent=1 // pred_fallthru
      _
    // Predicated region
    $region50: #{tpu_custom_call.1} parent=1 // pred_check
      _
    $region51: #{tpu_custom_call.1} parent=1 // pred_check_branch
      %123 = sbr.rel (0) target = $region53
    $region52: #{tpu_custom_call.1} parent=1 // pred_region
      %124 = dma.done [#allocation8], 32
    $region53: #{tpu_custom_call.1} parent=1 // pred_fallthru
      _
    // Predicated region
    $region54: #{tpu_custom_call.1} parent=1 // pred_check
      _
    $region55: #{tpu_custom_call.1} parent=1 // pred_check_branch
      %126 = sbr.rel (0) target = $region57
    $region56: #{tpu_custom_call.1} parent=1 // pred_region
      %127 = dma.done [#allocation11], 16
    $region57: #{tpu_custom_call.1} parent=1 // pred_fallthru
      _
    // Predicated region
    $region58: #{tpu_custom_call.1} parent=1 // pred_check
      _
    $region59: #{tpu_custom_call.1} parent=1 // pred_check_branch
      %129 = sbr.rel (0) target = $region61
    $region60: #{tpu_custom_call.1} parent=1 // pred_region
      %130 = dma.done [#allocation11], 64
    $region61: #{tpu_custom_call.1} parent=1 // pred_fallthru
      _
    // Predicated region
    $region62: #{tpu_custom_call.1} parent=1 // pred_check
      _
    $region63: #{tpu_custom_call.1} parent=1 // pred_check_branch
      %132 = sbr.rel (0) target = $region65
    $region64: #{tpu_custom_call.1} parent=1 // pred_region
      %133 = dma.done [#allocation14], 16
    $region65: #{tpu_custom_call.1} parent=1 // pred_fallthru
      _
    // Predicated region
    $region66: #{tpu_custom_call.1} parent=1 // pred_check
      _
    $region67: #{tpu_custom_call.1} parent=1 // pred_check_branch
      %135 = sbr.rel (0) target = $region69
    $region68: #{tpu_custom_call.1} parent=1 // pred_region
      %136 = dma.done [#allocation14], 32
    $region69: #{tpu_custom_call.1} parent=1 // pred_fallthru
      _
    // Predicated region
    $region70: #{tpu_custom_call.1} parent=1 // pred_check
      _
    $region71: #{tpu_custom_call.1} parent=1 // pred_check_branch
      %138 = sbr.rel (0) target = $region73
    $region72: #{tpu_custom_call.1} parent=1 // pred_region
      %139 = dma.done [#allocation17], 16
    $region73: #{tpu_custom_call.1} parent=1 // pred_fallthru
      _
    %140 = sfence
    %v141 = vld [vmem:[#allocation2] sm:$0xff]
    %s142 = scalar_lea.vmem [#allocation2], 8
    %v143 = vld [vmem:[%s142] sm:$0xff]
    %s144 = sld [smem:[#allocation6]]
    %v145 = vstv %s144
    %v146 = vmul.f32 %v145, %v141
    %s147 = sld [smem:[#allocation6 + $0x1]]
    %v148 = vstv %s147
    %v149 = vmul.f32 %v148, %v143
    %v150 = vadd.f32 %v146, %v149
    %s151 = sld [smem:[#allocation7]]
    %v152 = vstv %s151
    %v153 = vadd.f32 %v150, %v152
    %v154 = vmax.f32 %v153, 0.0
    %s155 = sld [smem:[#allocation6 + $0x80]]
    %v156 = vstv %s155
    %v157 = vmul.f32 %v156, %v141
    %s158 = sld [smem:[#allocation6 + $0x81]]
    %v159 = vstv %s158
    %v160 = vmul.f32 %v159, %v143
    %v161 = vadd.f32 %v157, %v160
    %s162 = sld [smem:[#allocation7 + $0x1]]
    %v163 = vstv %s162
    %v164 = vadd.f32 %v161, %v163
    %v165 = vmax.f32 %v164, 0.0
    %s166 = sld [smem:[#allocation6 + $0x100]]
    %v167 = vstv %s166
    %v168 = vmul.f32 %v167, %v141
    %s169 = sld [smem:[#allocation6 + $0x101]]
    %v170 = vstv %s169
    %v171 = vmul.f32 %v170, %v143
    %v172 = vadd.f32 %v168, %v171
    %s173 = sld [smem:[#allocation7 + $0x2]]
    %v174 = vstv %s173
    %v175 = vadd.f32 %v172, %v174
    %v176 = vmax.f32 %v175, 0.0
    %s177 = sld [smem:[#allocation6 + $0x180]]
    %v178 = vstv %s177
    %v179 = vmul.f32 %v178, %v141
    %s180 = sld [smem:[#allocation6 + $0x181]]
    %v181 = vstv %s180
    %v182 = vmul.f32 %v181, %v143
    %v183 = vadd.f32 %v179, %v182
    %s184 = sld [smem:[#allocation7 + $0x3]]
    %v185 = vstv %s184
    %v186 = vadd.f32 %v183, %v185
    %v187 = vmax.f32 %v186, 0.0
    %s188 = sld [smem:[#allocation9]]
    %v189 = vstv %s188
    %v190 = vmul.f32 %v189, %v154
    %s191 = sld [smem:[#allocation9 + $0x1]]
    %v192 = vstv %s191
    %v193 = vmul.f32 %v192, %v165
    %v194 = vadd.f32 %v190, %v193
    %s195 = sld [smem:[#allocation9 + $0x2]]
    %v196 = vstv %s195
    %v197 = vmul.f32 %v196, %v176
    %v198 = vadd.f32 %v194, %v197
    %s199 = sld [smem:[#allocation9 + $0x3]]
    %v200 = vstv %s199
    %v201 = vmul.f32 %v200, %v187
    %v202 = vadd.f32 %v198, %v201
    %s203 = sld [smem:[#allocation10]]
    %v204 = vstv %s203
    %v205 = vadd.f32 %v202, %v204
    %s206 = sld [smem:[#allocation9 + $0x80]]
    %v207 = vstv %s206
    %v208 = vmul.f32 %v207, %v154
    %s209 = sld [smem:[#allocation9 + $0x81]]
    %v210 = vstv %s209
    %v211 = vmul.f32 %v210, %v165
    %v212 = vadd.f32 %v208, %v211
    %s213 = sld [smem:[#allocation9 + $0x82]]
    %v214 = vstv %s213
    %v215 = vmul.f32 %v214, %v176
    %v216 = vadd.f32 %v212, %v215
    %s217 = sld [smem:[#allocation9 + $0x83]]
    %v218 = vstv %s217
    %v219 = vmul.f32 %v218, %v187
    %v220 = vadd.f32 %v216, %v219
    %s221 = sld [smem:[#allocation10 + $0x1]]
    %v222 = vstv %s221
    %v223 = vadd.f32 %v220, %v222
    %s224 = sld [smem:[#allocation12]]
    %v225 = vstv %s224
    %v226 = vmul.f32 %v225, %v205
    %s227 = sld [smem:[#allocation12 + $0x1]]
    %v228 = vstv %s227
    %v229 = vmul.f32 %v228, %v223
    %v230 = vadd.f32 %v226, %v229
    %s231 = sld [smem:[#allocation13]]
    %v232 = vstv %s231
    %v233 = vadd.f32 %v230, %v232
    %v234 = vmax.f32 %v233, 0.0
    %s235 = sld [smem:[#allocation12 + $0x80]]
    %v236 = vstv %s235
    %v237 = vmul.f32 %v236, %v205
    %s238 = sld [smem:[#allocation12 + $0x81]]
    %v239 = vstv %s238
    %v240 = vmul.f32 %v239, %v223
    %v241 = vadd.f32 %v237, %v240
    %s242 = sld [smem:[#allocation13 + $0x1]]
    %v243 = vstv %s242
    %v244 = vadd.f32 %v241, %v243
    %v245 = vmax.f32 %v244, 0.0
    %s246 = sld [smem:[#allocation12 + $0x100]]
    %v247 = vstv %s246
    %v248 = vmul.f32 %v247, %v205
    %s249 = sld [smem:[#allocation12 + $0x101]]
    %v250 = vstv %s249
    %v251 = vmul.f32 %v250, %v223
    %v252 = vadd.f32 %v248, %v251
    %s253 = sld [smem:[#allocation13 + $0x2]]
    %v254 = vstv %s253
    %v255 = vadd.f32 %v252, %v254
    %v256 = vmax.f32 %v255, 0.0
    %s257 = sld [smem:[#allocation12 + $0x180]]
    %v258 = vstv %s257
    %v259 = vmul.f32 %v258, %v205
    %s260 = sld [smem:[#allocation12 + $0x181]]
    %v261 = vstv %s260
    %v262 = vmul.f32 %v261, %v223
    %v263 = vadd.f32 %v259, %v262
    %s264 = sld [smem:[#allocation13 + $0x3]]
    %v265 = vstv %s264
    %v266 = vadd.f32 %v263, %v265
    %v267 = vmax.f32 %v266, 0.0
    %s268 = sld [smem:[#allocation15]]
    %v269 = vstv %s268
    %v270 = vmul.f32 %v269, %v234
    %s271 = sld [smem:[#allocation15 + $0x1]]
    %v272 = vstv %s271
    %v273 = vmul.f32 %v272, %v245
    %v274 = vadd.f32 %v270, %v273
    %s275 = sld [smem:[#allocation15 + $0x2]]
    %v276 = vstv %s275
    %v277 = vmul.f32 %v276, %v256
    %v278 = vadd.f32 %v274, %v277
    %s279 = sld [smem:[#allocation15 + $0x3]]
    %v280 = vstv %s279
    %v281 = vmul.f32 %v280, %v267
    %v282 = vadd.f32 %v278, %v281
    %s283 = sld [smem:[#allocation16]]
    %v284 = vstv %s283
    %v285 = vadd.f32 %v282, %v284
    %v286 = vtanh.pop %v285
    %v287 = vmul.f32 %v286, 0.5
    %v288 = vadd.f32 %v287, 0.5
    %289 = vst [vmem:[#allocation18] sm:$0xff] %v288
    %s290 = sld [smem:[#allocation15 + $0x80]]
    %v291 = vstv %s290
    %v292 = vmul.f32 %v291, %v234
    %s293 = sld [smem:[#allocation15 + $0x81]]
    %v294 = vstv %s293
    %v295 = vmul.f32 %v294, %v245
    %v296 = vadd.f32 %v292, %v295
    %s297 = sld [smem:[#allocation15 + $0x82]]
    %v298 = vstv %s297
    %v299 = vmul.f32 %v298, %v256
    %v300 = vadd.f32 %v296, %v299
    %s301 = sld [smem:[#allocation15 + $0x83]]
    %v302 = vstv %s301
    %v303 = vmul.f32 %v302, %v267
    %v304 = vadd.f32 %v300, %v303
    %s305 = sld [smem:[#allocation16 + $0x1]]
    %v306 = vstv %s305
    %v307 = vadd.f32 %v304, %v306
    %v308 = vtanh.pop %v307
    %v309 = vmul.f32 %v308, 0.5
    %v310 = vadd.f32 %v309, 0.5
    %s311 = scalar_lea.vmem [#allocation18], 8
    %312 = vst [vmem:[%s311] sm:$0xff] %v310
    // Predicated region
    $region74: #{tpu_custom_call.1} parent=1 // pred_check
      _
    $region75: #{tpu_custom_call.1} parent=1 // pred_check_branch
      %314 = sbr.rel (0) target = $region77
    $region76: #{tpu_custom_call.1} parent=1 // pred_region
      %s316 = ssub.s32 256, 256
      %317 = vsyncadd [#allocation4], %s316
      %s318 = sshll.u32 [#allocation18], 4
      %s319 = int_to_ptr.vmem [resolvable:$true] %s318
      %324 = dma.vmem_to_hbm [thread:$0]  %s319, 256, %s9, [#allocation4], 128, 128, 8
    $region77: #{tpu_custom_call.1} parent=1 // pred_fallthru
      _
    // Predicated region
    $region78: #{tpu_custom_call.1} parent=1 // pred_check
      _
    $region79: #{tpu_custom_call.1} parent=1 // pred_check_branch
      %326 = sbr.rel (0) target = $region81
    $region80: #{tpu_custom_call.1} parent=1 // pred_region
      %327 = dma.done [#allocation4], 256
    $region81: #{tpu_custom_call.1} parent=1 // pred_fallthru
      _
    %328 = vsyncpa [#allocation3], 1
    %329 = vsyncpa [#allocation4], 1
    %330 = vsyncpa [#allocation5], 1
    %331 = vsyncpa [#allocation8], 1
    %332 = vsyncpa [#allocation11], 1
    %333 = vsyncpa [#allocation14], 1
    %334 = vsyncpa [#allocation17], 1

</llo_original>
